<compile_context>
chip_gen: v7x
topology: tpu7x:2x2x1
jax: 0.10.0
libtpu: 0.0.40
codegen_flags: <defaults>
</compile_context>

<pallas_src>
import jax
import jax.numpy as jnp
from jax import lax
from jax.experimental import pallas as pl
from jax.experimental.pallas import tpu as pltpu


def _round_up(x, m):
    return (x + m - 1) // m * m


def _linear_relu_kernel(x_ref, w_ref, b_ref, o_ref, acc_ref):
    # x_ref  : [tm, tk]  compute dtype (bf16)
    # w_ref  : [tn, tk]  compute dtype (bf16)  -- PyTorch layout, K is last dim
    # b_ref  : [1,  tn]  f32
    # o_ref  : [tm, tn]  output dtype
    # acc_ref: [tm, tn]  f32 scratch accumulator (resident across the K axis)
    k = pl.program_id(2)

    @pl.when(k == 0)
    def _():
        acc_ref[...] = jnp.zeros_like(acc_ref)

    # x @ w.T without materializing a transpose: contract K axis of both.
    acc_ref[...] += lax.dot_general(
        x_ref[...], w_ref[...],
        dimension_numbers=(((1,), (1,)), ((), ())),
        preferred_element_type=jnp.float32,
    )

    @pl.when(k == pl.num_programs(2) - 1)
    def _():
        acc = acc_ref[...] + b_ref[...]          # f32 bias add (broadcast rows)
        o_ref[...] = jnp.maximum(acc, 0.0).astype(o_ref.dtype)


def image_finetune_forward(image, weight, bias, *, tm=None, tn=None, tk=None,
                           compute_dtype=jnp.bfloat16):
    """image: [M, in_dim]; weight: [out_dim, in_dim] (PyTorch layout); bias: [out_dim]."""
    M, K = image.shape
    N = bias.shape[0]
    assert weight.shape == (N, K)
    out_dtype = image.dtype

    # ---- tile selection ----------------------------------------------------
    # M: multiple of 8 sublanes, capped so large M yields multiple 'parallel'
    #    row tiles (megacore on v7x) and per-step overhead is amortized.
    if tm is None:
        tm = min(_round_up(M, 8), 256)
    # N: lane-dense (multiple of 128); 256 matches v6e/v7x MXU width while
    #    still fitting v5e's scoped VMEM comfortably at these tile sizes.
    if tn is None:
        tn = min(_round_up(N, 128), 256)
    # K: single block when small; otherwise 512-wide chunks (multiple of 128)
    #    accumulated into the f32 scratch.
    if tk is None:
        tk = K if K <= 1024 else 512

    Mp = _round_up(M, tm)
    Np = _round_up(N, tn)
    Kp = _round_up(K, tk)

    # ---- prepare operands (zero padding is exact for matmul + bias + relu) --
    x = image.astype(compute_dtype)
    w = weight.astype(compute_dtype)            # stays [N, K]; no host transpose
    b = bias.astype(jnp.float32).reshape(1, N)

    if (Mp, Kp) != (M, K):
        x = jnp.pad(x, ((0, Mp - M), (0, Kp - K)))
    if (Np, Kp) != (N, K):
        w = jnp.pad(w, ((0, Np - N), (0, Kp - K)))
    if Np != N:
        b = jnp.pad(b, ((0, 0), (0, Np - N)))

    grid = (Mp // tm, Np // tn, Kp // tk)

    out = pl.pallas_call(
        _linear_relu_kernel,
        out_shape=jax.ShapeDtypeStruct((Mp, Np), out_dtype),
        grid_spec=pltpu.PrefetchScalarGridSpec(
            num_scalar_prefetch=0,
            grid=grid,
            in_specs=[
                pl.BlockSpec((tm, tk), lambda i, j, k: (i, k)),   # image rows
                pl.BlockSpec((tn, tk), lambda i, j, k: (j, k)),   # weight [N,K] tile
                pl.BlockSpec((1, tn), lambda i, j, k: (0, j)),    # bias slice
            ],
            out_specs=pl.BlockSpec((tm, tn), lambda i, j, k: (i, j)),
            scratch_shapes=[pltpu.VMEM((tm, tn), jnp.float32)],
        ),
        compiler_params=pltpu.CompilerParams(
            dimension_semantics=("parallel", "parallel", "arbitrary")),
    )(x, w, b)

    if (Mp, Np) != (M, N):
        out = out[:M, :N]
    return out


if __name__ == "__main__":
    # Small, deterministic synthetic setup (replaces pickle weight/bias files).
    key = jax.random.PRNGKey(0)
    k_x, k_w, k_b = jax.random.split(key, 3)

    batch, in_dim, out_dim = 8, 32, 64          # image: [batch, in_dim]

    image = jax.random.normal(k_x, (batch, in_dim), dtype=jnp.float32)
    weight = jax.random.normal(k_w, (out_dim, in_dim), dtype=jnp.float32) * 0.1
    bias = jax.random.normal(k_b, (out_dim,), dtype=jnp.float32) * 0.1

    out = image_finetune_forward(image, weight, bias)
    out = jax.block_until_ready(out)

    # Reference check in plain JAX (same math as PyTorch nn.Linear + relu).
    # Tolerance accounts for the bf16 input cast (accumulation is f32).
    ref = jnp.maximum(image @ weight.T + bias, 0.0)
    assert out.shape == (batch, out_dim)
    assert jnp.allclose(out, ref, atol=2e-2, rtol=2e-2)

    print("KERNEL_OK")
</pallas_src>

<mosaic_0001>
module attributes {stable_mosaic.version = 11 : i64} {
  func.func @_linear_relu_kernel(%arg0: i32, %arg1: i32, %arg2: i32, %arg3: memref<8x32xbf16, #tpu.memory_space<vmem>>, %arg4: memref<128x32xbf16, #tpu.memory_space<vmem>>, %arg5: memref<1x128xf32, #tpu.memory_space<vmem>>, %arg6: memref<8x128xf32, #tpu.memory_space<vmem>>, %arg7: memref<8x128xf32, #tpu.memory_space<vmem>>) attributes {dimension_semantics = [#tpu.dimension_semantics<parallel>, #tpu.dimension_semantics<parallel>, #tpu.dimension_semantics<arbitrary>], iteration_bounds = array<i64: 1, 1, 1>, scalar_prefetch = 0 : i64, scratch_operands = 1 : i64, tpu.core_type = #tpu.core_type<tc>, window_params = [{transform_indices = @transform_0, window_bounds = array<i64: 8, 32>}, {transform_indices = @transform_1, window_bounds = array<i64: 128, 32>}, {transform_indices = @transform_2, window_bounds = array<i64: 1, 128>}, {transform_indices = @transform_3, window_bounds = array<i64: 8, 128>}]} {
    %c0_i32 = arith.constant 0 : i32
    %0 = arith.cmpi eq, %arg2, %c0_i32 : i32
    %1 = arith.extui %0 : i1 to i32
    %c0_i32_0 = arith.constant 0 : i32
    %2 = arith.cmpi ne, %1, %c0_i32_0 : i32
    scf.if %2 {
      %cst_10 = arith.constant 0.000000e+00 : f32
      %12 = vector.broadcast %cst_10 : f32 to vector<8x128xf32>
      %c0_11 = arith.constant 0 : index
      %c0_12 = arith.constant 0 : index
      %13 = vector.load %arg7[%c0_11, %c0_12] : memref<8x128xf32, #tpu.memory_space<vmem>>, vector<8x128xf32>
      tpu.vector_store %arg7[%c0_11, %c0_12], %12 {strides = array<i32>} : memref<8x128xf32, #tpu.memory_space<vmem>>, vector<8x128xf32>,
    } else {
    }
    %c0 = arith.constant 0 : index
    %c0_1 = arith.constant 0 : index
    %3 = vector.load %arg7[%c0, %c0_1] : memref<8x128xf32, #tpu.memory_space<vmem>>, vector<8x128xf32>
    %c0_2 = arith.constant 0 : index
    %c0_3 = arith.constant 0 : index
    %4 = vector.load %arg3[%c0_2, %c0_3] : memref<8x32xbf16, #tpu.memory_space<vmem>>, vector<8x32xbf16>
    %c0_4 = arith.constant 0 : index
    %c0_5 = arith.constant 0 : index
    %5 = vector.load %arg4[%c0_4, %c0_5] : memref<128x32xbf16, #tpu.memory_space<vmem>>, vector<128x32xbf16>
    %cst = arith.constant dense<0.000000e+00> : vector<8x128xf32>
    %6 = tpu.matmul %4, %5, %cst {dimension_numbers = #tpu.dot_dimension_numbers<[1], [1], [0], [0], [0, 0, 1, 0], [], []>} : vector<8x32xbf16>, vector<128x32xbf16>, vector<8x128xf32> -> vector<8x128xf32>
    %7 = arith.addf %3, %6 : vector<8x128xf32>
    %c0_6 = arith.constant 0 : index
    %c0_7 = arith.constant 0 : index
    %8 = vector.load %arg7[%c0_6, %c0_7] : memref<8x128xf32, #tpu.memory_space<vmem>>, vector<8x128xf32>
    tpu.vector_store %arg7[%c0_6, %c0_7], %7 {strides = array<i32>} : memref<8x128xf32, #tpu.memory_space<vmem>>, vector<8x128xf32>,
    %c0_i32_8 = arith.constant 0 : i32
    %9 = arith.cmpi eq, %arg2, %c0_i32_8 : i32
    %10 = arith.extui %9 : i1 to i32
    %c0_i32_9 = arith.constant 0 : i32
    %11 = arith.cmpi ne, %10, %c0_i32_9 : i32
    scf.if %11 {
      %c0_10 = arith.constant 0 : index
      %c0_11 = arith.constant 0 : index
      %12 = vector.load %arg7[%c0_10, %c0_11] : memref<8x128xf32, #tpu.memory_space<vmem>>, vector<8x128xf32>
      %c0_12 = arith.constant 0 : index
      %c0_13 = arith.constant 0 : index
      %13 = vector.load %arg5[%c0_12, %c0_13] : memref<1x128xf32, #tpu.memory_space<vmem>>, vector<1x128xf32>
      %14 = vector.broadcast %13 : vector<1x128xf32> to vector<8x128xf32>
      %15 = arith.addf %12, %14 : vector<8x128xf32>
      %cst_14 = arith.constant 0.000000e+00 : f32
      %16 = vector.broadcast %cst_14 : f32 to vector<8x128xf32>
      %17 = arith.maximumf %15, %16 : vector<8x128xf32>
      %c0_15 = arith.constant 0 : index
      %c0_16 = arith.constant 0 : index
      %18 = vector.load %arg6[%c0_15, %c0_16] : memref<8x128xf32, #tpu.memory_space<vmem>>, vector<8x128xf32>
      tpu.vector_store %arg6[%c0_15, %c0_16], %17 {strides = array<i32>} : memref<8x128xf32, #tpu.memory_space<vmem>>, vector<8x128xf32>,
    } else {
    }
    return
  }
  func.func @transform_0(%arg0: i32, %arg1: i32, %arg2: i32) -> (i32, i32) {
    %c0_i32 = arith.constant 0 : i32
    return %arg0, %arg2 : i32, i32
  }
  func.func @transform_1(%arg0: i32, %arg1: i32, %arg2: i32) -> (i32, i32) {
    %c0_i32 = arith.constant 0 : i32
    return %arg1, %arg2 : i32, i32
  }
  func.func @transform_2(%arg0: i32, %arg1: i32, %arg2: i32) -> (i32, i32) {
    %c0_i32 = arith.constant 0 : i32
    %c0_i32_0 = arith.constant 0 : i32
    return %c0_i32, %arg1 : i32, i32
  }
  func.func @transform_3(%arg0: i32, %arg1: i32, %arg2: i32) -> (i32, i32) {
    %c0_i32 = arith.constant 0 : i32
    return %arg0, %arg1 : i32, i32
  }
}

</mosaic_0001>

<llo_original>
// kernel: tpu_custom_call.1
$region0: #{tpu_custom_call.1}
  #allocation0 [shape = 'u32[]', space=smem, size = 0x4, offset = 0x4, fixed_abs, tag = 'smem constant byte address 0x4 - core index']
  #allocation1 [shape = 'u32[144,128]{1,0:T(1,128)}', space=vmem, size = 0x12000, scoped, tag = 'internal scratch']
  #allocation2 [shape = 'f32[8,128]{1,0:T(8,128)}', space=vmem, size = 0x1000, scoped, tag = 'scratch operand']
  %s0 = inlined_call_operand.vmem [shape: bf16[8,32], index: 0, kind: input, shape index: {}]
  %s1 = inlined_call_operand.vmem [shape: bf16[128,32], index: 1, kind: input, shape index: {}]
  %s2 = inlined_call_operand.vmem [shape: f32[1,128], index: 2, kind: input, shape index: {}]
  %s3 = inlined_call_operand.hbm [shape: f32[8,128], index: 3, kind: output, shape index: {}]
  %s4 = sld [smem:[#allocation0]]
  $region30: #{tpu_custom_call.1} parent=0
    _
  %s6 = ssub.s32 1, %s4
  %s7 = scalar_select 0, %s6, %s4
  $region1: #{tpu_custom_call.1} parent=0
    #allocation3 [shape = 'u8[4096]{0}', space=vmem, size = 0x1000, scoped, tag = 'output window, operand 0, single buffered']
    #allocation4 [shape = 's32[1]{0}', space=sflag, size = 0x4, scoped, tag = 'scoped memory for tpu_custom_call.1']
    %8 = vsyncpa [#allocation4], 0
    // Predicated region
    $region2: #{tpu_custom_call.1} parent=1 // pred_check
      _
    $region3: #{tpu_custom_call.1} parent=1 // pred_check_branch
      %10 = sbr.rel (0) target = $region5
    $region4: #{tpu_custom_call.1} parent=1 // pred_region
      _
    $region5: #{tpu_custom_call.1} parent=1 // pred_fallthru
      _
    // Predicated region
    $region6: #{tpu_custom_call.1} parent=1 // pred_check
      _
    $region7: #{tpu_custom_call.1} parent=1 // pred_check_branch
      %12 = sbr.rel (0) target = $region9
    $region8: #{tpu_custom_call.1} parent=1 // pred_region
      _
    $region9: #{tpu_custom_call.1} parent=1 // pred_fallthru
      _
    // Predicated region
    $region10: #{tpu_custom_call.1} parent=1 // pred_check
      _
    $region11: #{tpu_custom_call.1} parent=1 // pred_check_branch
      %14 = sbr.rel (0) target = $region13
    $region12: #{tpu_custom_call.1} parent=1 // pred_region
      _
    $region13: #{tpu_custom_call.1} parent=1 // pred_fallthru
      _
    %p16 = scmp.eq.s32.totalorder 0, 0
    // Predicated region
    $region14: #{tpu_custom_call.1} parent=1 // pred_check
      %p17 = pneg %p16
    $region15: #{tpu_custom_call.1} parent=1 // pred_check_branch
      %19 = sbr.rel (%p17) target = $region17
    $region16: #{tpu_custom_call.1} parent=1 // pred_region
      %20 = vst [vmem:[#allocation2] sm:$0xff] 0.0
    $region17: #{tpu_custom_call.1} parent=1 // pred_fallthru
      _
    %v21 = vld [vmem:[#allocation2] sm:$0xff]
    %v22 = vld [vmem:[%s0] sm:$0xf]
    %v23 = vld [vmem:[%s1] sm:$0xf]
    %v24 = vld [vmem:[%s1 + $0x4] sm:$0xf]
    %v25 = vld [vmem:[%s1 + $0x8] sm:$0xf]
    %v26 = vld [vmem:[%s1 + $0xc] sm:$0xf]
    %v27 = vld [vmem:[%s1 + $0x10] sm:$0xf]
    %v28 = vld [vmem:[%s1 + $0x14] sm:$0xf]
    %v29 = vld [vmem:[%s1 + $0x18] sm:$0xf]
    %v30 = vld [vmem:[%s1 + $0x1c] sm:$0xf]
    %v31 = vld [vmem:[%s1 + $0x20] sm:$0xf]
    %v32 = vld [vmem:[%s1 + $0x24] sm:$0xf]
    %v33 = vld [vmem:[%s1 + $0x28] sm:$0xf]
    %v34 = vld [vmem:[%s1 + $0x2c] sm:$0xf]
    %v35 = vld [vmem:[%s1 + $0x30] sm:$0xf]
    %v36 = vld [vmem:[%s1 + $0x34] sm:$0xf]
    %v37 = vld [vmem:[%s1 + $0x38] sm:$0xf]
    %v38 = vld [vmem:[%s1 + $0x3c] sm:$0xf]
    %v55 = vunpack.c.l.b16 %v23
    %v56 = vunpack.c.l.b16 %v24
    %v57 = vunpack.c.l.b16 %v25
    %v58 = vunpack.c.l.b16 %v26
    %v59 = vunpack.c.l.b16 %v27
    %v60 = vunpack.c.l.b16 %v28
    %v61 = vunpack.c.l.b16 %v29
    %v62 = vunpack.c.l.b16 %v30
    %v63 = vunpack.c.l.b16 %v31
    %v64 = vunpack.c.l.b16 %v32
    %v65 = vunpack.c.l.b16 %v33
    %v66 = vunpack.c.l.b16 %v34
    %v67 = vunpack.c.l.b16 %v35
    %v68 = vunpack.c.l.b16 %v36
    %v69 = vunpack.c.l.b16 %v37
    %v70 = vunpack.c.l.b16 %v38
    %v71 = vpack.c.b16 %v56, %v55
    %v72 = vpack.c.b16 %v58, %v57
    %v73 = vpack.c.b16 %v60, %v59
    %v74 = vpack.c.b16 %v62, %v61
    %v75 = vpack.c.b16 %v64, %v63
    %v76 = vpack.c.b16 %v66, %v65
    %v77 = vpack.c.b16 %v68, %v67
    %v78 = vpack.c.b16 %v70, %v69
    %vm79 = vcmask 261120
    %v81 = vsel %vm79, %v22, 0
    %v84 = vsel %vm79, %v71, 0
    %v87 = vsel %vm79, %v72, 0
    %v90 = vsel %vm79, %v73, 0
    %v93 = vsel %vm79, %v74, 0
    %v96 = vsel %vm79, %v75, 0
    %v99 = vsel %vm79, %v76, 0
    %v102 = vsel %vm79, %v77, 0
    %v105 = vsel %vm79, %v78, 0
    %107 = vmatprep.subr.bf16.mxu0 0
    %108 = vmatpush1.bf16.xpose.msra.mxu0 %v84
    %109 = vmatprep.subr.bf16.mxu0 0
    %110 = vmatpush1.bf16.xpose.msra.mxu0 %v87
    %111 = vmatprep.subr.bf16.mxu0 0
    %112 = vmatpush1.bf16.xpose.msra.mxu0 %v90
    %113 = vmatprep.subr.bf16.mxu0 0
    %114 = vmatpush1.bf16.xpose.msra.mxu0 %v93
    %115 = vmatprep.subr.bf16.mxu0 0
    %116 = vmatpush1.bf16.xpose.msra.mxu0 %v96
    %117 = vmatprep.subr.bf16.mxu0 0
    %118 = vmatpush1.bf16.xpose.msra.mxu0 %v99
    %119 = vmatprep.subr.bf16.mxu0 0
    %120 = vmatpush1.bf16.xpose.msra.mxu0 %v102
    %121 = vmatprep.subr.bf16.mxu0 0
    %122 = vmatpush1.bf16.xpose.msra.mxu0 %v105
    %123 = vmatprep.subr.bf16.mxu0 0
    %124 = vmatpush1.bf16.xpose.msra.mxu0 0
    %125 = vmatprep.subr.bf16.mxu0 0
    %126 = vmatpush1.bf16.xpose.msra.mxu0 0
    %127 = vmatprep.subr.bf16.mxu0 0
    %128 = vmatpush1.bf16.xpose.msra.mxu0 0
    %129 = vmatprep.subr.bf16.mxu0 0
    %130 = vmatpush1.bf16.xpose.msra.mxu0 0
    %131 = vmatprep.subr.bf16.mxu0 0
    %132 = vmatpush1.bf16.xpose.msra.mxu0 0
    %133 = vmatprep.subr.bf16.mxu0 0
    %134 = vmatpush1.bf16.xpose.msra.mxu0 0
    %135 = vmatprep.subr.bf16.mxu0 0
    %136 = vmatpush1.bf16.xpose.msra.mxu0 0
    %137 = vmatprep.subr.bf16.mxu0 0
    %138 = vmatpush1.bf16.xpose.msra.mxu0 0
    %139 = vmatprep.mubr.bf16.mxu0 0
    %140 = vmatmul.mubr.bf16.gmra.mrb[0].mxu0 %v81
    %v141 = vpop.f32.mrb[0].mxu0
    %v142 = vadd.f32 0.0, %v141
    %v143 = vpop.f32.mrb[0].mxu0
    %v144 = vpop.f32.mrb[0].mxu0
    %v145 = vpop.f32.mrb[0].mxu0
    %146 = vdwg.mxu0
    %v147 = vadd.f32 %v21, %v142
    %148 = vst [vmem:[#allocation2] sm:$0xff] %v147
    // Predicated region
    $region18: #{tpu_custom_call.1} parent=1 // pred_check
      %p149 = pneg %p16
    $region19: #{tpu_custom_call.1} parent=1 // pred_check_branch
      %151 = sbr.rel (%p149) target = $region21
    $region20: #{tpu_custom_call.1} parent=1 // pred_region
      %v152 = vld [vmem:[#allocation2] sm:$0xff]
      %v153 = vld [vmem:[%s2] sm:$0x1]
      %v155 = vlaneseq
      %v156 = vshrl.u32 %v155, 7
      %v157 = vsub.s32 0, %v156
      %v158 = vrot.slane %v153, %v157
      %v160 = vadd.f32 %v152, %v158
      %v161 = vmax.f32 %v160, 0.0
      %162 = vst [vmem:[#allocation3] sm:$0xff] %v161
    $region21: #{tpu_custom_call.1} parent=1 // pred_fallthru
      _
    // Predicated region
    $region22: #{tpu_custom_call.1} parent=1 // pred_check
      _
    $region23: #{tpu_custom_call.1} parent=1 // pred_check_branch
      %164 = sbr.rel (0) target = $region25
    $region24: #{tpu_custom_call.1} parent=1 // pred_region
      %s166 = ssub.s32 128, 128
      %167 = vsyncadd [#allocation4], %s166
      %s169 = sshll.u32 [#allocation3], 4
      %s170 = int_to_ptr.vmem [resolvable:$true] %s169
      %172 = dma.vmem_to_hbm [thread:$0]  %s170, 128, %s3, [#allocation4]
    $region25: #{tpu_custom_call.1} parent=1 // pred_fallthru
      _
    // Predicated region
    $region26: #{tpu_custom_call.1} parent=1 // pred_check
      _
    $region27: #{tpu_custom_call.1} parent=1 // pred_check_branch
      %174 = sbr.rel (0) target = $region29
    $region28: #{tpu_custom_call.1} parent=1 // pred_region
      %175 = dma.done [#allocation4], 128
    $region29: #{tpu_custom_call.1} parent=1 // pred_fallthru
      _
    %176 = vsyncpa [#allocation4], 1

</llo_original>
